<compile_context>
chip_gen: v7x
topology: tpu7x:2x2x1
jax: 0.10.0
libtpu: 0.0.40
codegen_flags: <defaults>
</compile_context>

<pallas_src>
import jax
import jax.numpy as jnp
from jax.experimental import pallas as pl
from jax.experimental.pallas import tpu as pltpu


def _round_up(x, m):
    return ((x + m - 1) // m) * m


def residual_linear_kernel(x_mm_ref, w_ref, b_ref, x_res_ref, o_ref, acc_ref):
    """One (i, j, k) grid step of   out = x + (x @ W + b).

    x_mm_ref : (TM, TK)  K-slice of the activations (matmul operand)
    w_ref    : (TK, TN)  (k, j) tile of the weight (input-major)
    b_ref    : (1,  TN)  bias tile (already f32)
    x_res_ref: (TM, TN)  (i, j) tile of the activations for the residual add
    o_ref    : (TM, TN)  output tile (resident across the K axis)
    acc_ref  : (TM, TN)  f32 VMEM accumulator scratch
    """
    k = pl.program_id(2)

    @pl.when(k == 0)
    def _init():
        acc_ref[...] = jnp.zeros_like(acc_ref)

    acc_ref[...] += jnp.dot(
        x_mm_ref[...], w_ref[...], preferred_element_type=jnp.float32
    )

    @pl.when(k == pl.num_programs(2) - 1)
    def _finalize():
        res = x_res_ref[...].astype(jnp.float32)
        o_ref[...] = (res + acc_ref[...] + b_ref[...]).astype(o_ref.dtype)


def residual_linear(x, w, b):
    """x: (B, S, H). w: (H, H) input-major (computes x @ w). b: (H,).

    Returns x + (x @ w + b), shape (B, S, H).
    """
    B, S, H = x.shape
    M = B * S
    x2d = x.reshape(M, H)

    # --- pad to lane/sublane-friendly sizes --------------------------------
    H_pad = _round_up(H, 128)  # lane axis: multiple of 128 (unmasked vst)
    # Weight tile: largest MXU-friendly size that divides the padded hidden.
    tn = tk = next(t for t in (512, 256, 128) if H_pad % t == 0)
    # Row tile: up to 512 rows, at least 8 (f32 sublane packing).
    if M <= 512:
        tm = max(_round_up(M, 8), 8)
        M_pad = tm
    else:
        tm = 512
        M_pad = _round_up(M, tm)

    # Zero padding keeps the math exact (padded rows/cols contribute 0).
    x_p = jnp.pad(x2d, ((0, M_pad - M), (0, H_pad - H)))
    w_p = jnp.pad(w, ((0, H_pad - H), (0, H_pad - H)))
    # Hoist the bias cast: store f32 once instead of casting every grid step.
    b_p = jnp.pad(b.astype(jnp.float32), (0, H_pad - H)).reshape(1, H_pad)

    grid = (M_pad // tm, H_pad // tn, H_pad // tk)

    itemsize = jnp.dtype(x.dtype).itemsize
    cost = pl.CostEstimate(
        flops=2 * M_pad * H_pad * H_pad,
        transcendentals=0,
        bytes_accessed=(3 * M_pad * H_pad + H_pad * H_pad) * itemsize
        + H_pad * 4,
    )

    out = pl.pallas_call(
        residual_linear_kernel,
        out_shape=jax.ShapeDtypeStruct((M_pad, H_pad), x.dtype),
        grid_spec=pltpu.PrefetchScalarGridSpec(
            num_scalar_prefetch=0,
            grid=grid,
            in_specs=[
                pl.BlockSpec((tm, tk), lambda i, j, k: (i, k)),  # x (matmul)
                pl.BlockSpec((tk, tn), lambda i, j, k: (k, j)),  # W tile
                pl.BlockSpec((1, tn), lambda i, j, k: (0, j)),   # bias tile
                pl.BlockSpec((tm, tn), lambda i, j, k: (i, j)),  # x (residual)
            ],
            out_specs=pl.BlockSpec((tm, tn), lambda i, j, k: (i, j)),
            scratch_shapes=[pltpu.VMEM((tm, tn), jnp.float32)],
        ),
        compiler_params=pltpu.CompilerParams(
            dimension_semantics=("parallel", "parallel", "arbitrary"),
        ),
        cost_estimate=cost,
    )(x_p, w_p, b_p, x_p)

    return out[:M, :H].reshape(B, S, H)


if __name__ == "__main__":
    key = jax.random.PRNGKey(0)
    k_x, k_w, k_b = jax.random.split(key, 3)

    B, S, H = 2, 8, 32  # batch=2, seq=8, hidden=32
    x = jax.random.normal(k_x, (B, S, H), dtype=jnp.float32)
    # "layer" parameters (torch Linear would be weight (H, H), bias (H,)).
    # Stored transposed (input-major) so the kernel computes x @ W directly.
    w = jax.random.normal(k_w, (H, H), dtype=jnp.float32) * 0.05
    b = jax.random.normal(k_b, (H,), dtype=jnp.float32) * 0.05

    out = residual_linear(x, w, b)
    jax.block_until_ready(out)

    # Reference: same semantics as torch's  x + Linear(x).
    ref = x + (jnp.einsum("bsh,hk->bsk", x, w) + b)
    assert jnp.allclose(out, ref, atol=1e-5, rtol=1e-5), "mismatch vs reference"

    # TODO(synk): the PyTorch `Residual` accepts any wrapped nn.Module; only the
    # Linear instantiation is fused here — other layer types need their own kernels.
    print("KERNEL_OK")
</pallas_src>

<mosaic_0001>
module attributes {stable_mosaic.version = 11 : i64} {
  func.func @residual_linear_kernel(%arg0: i32, %arg1: i32, %arg2: i32, %arg3: memref<16x128xf32, #tpu.memory_space<vmem>>, %arg4: memref<128x128xf32, #tpu.memory_space<vmem>>, %arg5: memref<1x128xf32, #tpu.memory_space<vmem>>, %arg6: memref<16x128xf32, #tpu.memory_space<vmem>>, %arg7: memref<16x128xf32, #tpu.memory_space<vmem>>, %arg8: memref<16x128xf32, #tpu.memory_space<vmem>>) attributes {dimension_semantics = [#tpu.dimension_semantics<parallel>, #tpu.dimension_semantics<parallel>, #tpu.dimension_semantics<arbitrary>], iteration_bounds = array<i64: 1, 1, 1>, scalar_prefetch = 0 : i64, scratch_operands = 1 : i64, tpu.core_type = #tpu.core_type<tc>, window_params = [{transform_indices = @transform_0, window_bounds = array<i64: 16, 128>}, {transform_indices = @transform_1, window_bounds = array<i64: 128, 128>}, {transform_indices = @transform_2, window_bounds = array<i64: 1, 128>}, {transform_indices = @transform_3, window_bounds = array<i64: 16, 128>}, {transform_indices = @transform_4, window_bounds = array<i64: 16, 128>}]} {
    %c0_i32 = arith.constant 0 : i32
    %0 = arith.cmpi eq, %arg2, %c0_i32 : i32
    %1 = arith.extui %0 : i1 to i32
    %c0_i32_0 = arith.constant 0 : i32
    %2 = arith.cmpi ne, %1, %c0_i32_0 : i32
    scf.if %2 {
      %cst_10 = arith.constant 0.000000e+00 : f32
      %12 = vector.broadcast %cst_10 : f32 to vector<16x128xf32>
      %c0_11 = arith.constant 0 : index
      %c0_12 = arith.constant 0 : index
      %13 = vector.load %arg8[%c0_11, %c0_12] : memref<16x128xf32, #tpu.memory_space<vmem>>, vector<16x128xf32>
      tpu.vector_store %arg8[%c0_11, %c0_12], %12 {strides = array<i32>} : memref<16x128xf32, #tpu.memory_space<vmem>>, vector<16x128xf32>,
    } else {
    }
    %c0 = arith.constant 0 : index
    %c0_1 = arith.constant 0 : index
    %3 = vector.load %arg8[%c0, %c0_1] : memref<16x128xf32, #tpu.memory_space<vmem>>, vector<16x128xf32>
    %c0_2 = arith.constant 0 : index
    %c0_3 = arith.constant 0 : index
    %4 = vector.load %arg3[%c0_2, %c0_3] : memref<16x128xf32, #tpu.memory_space<vmem>>, vector<16x128xf32>
    %c0_4 = arith.constant 0 : index
    %c0_5 = arith.constant 0 : index
    %5 = vector.load %arg4[%c0_4, %c0_5] : memref<128x128xf32, #tpu.memory_space<vmem>>, vector<128x128xf32>
    %cst = arith.constant dense<0.000000e+00> : vector<16x128xf32>
    %6 = tpu.matmul %4, %5, %cst {dimension_numbers = #tpu.dot_dimension_numbers<[1], [0], [0], [1], [0, 0, 1, 1], [], []>} : vector<16x128xf32>, vector<128x128xf32>, vector<16x128xf32> -> vector<16x128xf32>
    %7 = arith.addf %3, %6 : vector<16x128xf32>
    %c0_6 = arith.constant 0 : index
    %c0_7 = arith.constant 0 : index
    %8 = vector.load %arg8[%c0_6, %c0_7] : memref<16x128xf32, #tpu.memory_space<vmem>>, vector<16x128xf32>
    tpu.vector_store %arg8[%c0_6, %c0_7], %7 {strides = array<i32>} : memref<16x128xf32, #tpu.memory_space<vmem>>, vector<16x128xf32>,
    %c0_i32_8 = arith.constant 0 : i32
    %9 = arith.cmpi eq, %arg2, %c0_i32_8 : i32
    %10 = arith.extui %9 : i1 to i32
    %c0_i32_9 = arith.constant 0 : i32
    %11 = arith.cmpi ne, %10, %c0_i32_9 : i32
    scf.if %11 {
      %c0_10 = arith.constant 0 : index
      %c0_11 = arith.constant 0 : index
      %12 = vector.load %arg6[%c0_10, %c0_11] : memref<16x128xf32, #tpu.memory_space<vmem>>, vector<16x128xf32>
      %c0_12 = arith.constant 0 : index
      %c0_13 = arith.constant 0 : index
      %13 = vector.load %arg8[%c0_12, %c0_13] : memref<16x128xf32, #tpu.memory_space<vmem>>, vector<16x128xf32>
      %14 = arith.addf %12, %13 : vector<16x128xf32>
      %c0_14 = arith.constant 0 : index
      %c0_15 = arith.constant 0 : index
      %15 = vector.load %arg5[%c0_14, %c0_15] : memref<1x128xf32, #tpu.memory_space<vmem>>, vector<1x128xf32>
      %16 = vector.broadcast %15 : vector<1x128xf32> to vector<16x128xf32>
      %17 = arith.addf %14, %16 : vector<16x128xf32>
      %c0_16 = arith.constant 0 : index
      %c0_17 = arith.constant 0 : index
      %18 = vector.load %arg7[%c0_16, %c0_17] : memref<16x128xf32, #tpu.memory_space<vmem>>, vector<16x128xf32>
      tpu.vector_store %arg7[%c0_16, %c0_17], %17 {strides = array<i32>} : memref<16x128xf32, #tpu.memory_space<vmem>>, vector<16x128xf32>,
    } else {
    }
    return
  }
  func.func @transform_0(%arg0: i32, %arg1: i32, %arg2: i32) -> (i32, i32) {
    %c0_i32 = arith.constant 0 : i32
    return %arg0, %arg2 : i32, i32
  }
  func.func @transform_1(%arg0: i32, %arg1: i32, %arg2: i32) -> (i32, i32) {
    %c0_i32 = arith.constant 0 : i32
    return %arg2, %arg1 : i32, i32
  }
  func.func @transform_2(%arg0: i32, %arg1: i32, %arg2: i32) -> (i32, i32) {
    %c0_i32 = arith.constant 0 : i32
    %c0_i32_0 = arith.constant 0 : i32
    return %c0_i32, %arg1 : i32, i32
  }
  func.func @transform_3(%arg0: i32, %arg1: i32, %arg2: i32) -> (i32, i32) {
    %c0_i32 = arith.constant 0 : i32
    return %arg0, %arg1 : i32, i32
  }
  func.func @transform_4(%arg0: i32, %arg1: i32, %arg2: i32) -> (i32, i32) {
    %c0_i32 = arith.constant 0 : i32
    return %arg0, %arg1 : i32, i32
  }
}

</mosaic_0001>

<llo_original>
// kernel: tpu_custom_call.1
$region0: #{tpu_custom_call.1}
  #allocation0 [shape = 'u32[]', space=smem, size = 0x4, offset = 0x4, fixed_abs, tag = 'smem constant byte address 0x4 - core index']
  #allocation1 [shape = 'u32[144,128]{1,0:T(1,128)}', space=vmem, size = 0x12000, scoped, tag = 'internal scratch']
  #allocation2 [shape = 'f32[16,128]{1,0:T(8,128)}', space=vmem, size = 0x2000, scoped, tag = 'scratch operand']
  %s0 = inlined_call_operand.hbm [shape: f32[16,128], index: 0, kind: input, shape index: {}]
  %s1 = inlined_call_operand.hbm [shape: f32[128,128], index: 1, kind: input, shape index: {}]
  %s2 = inlined_call_operand.vmem [shape: f32[1,128], index: 2, kind: input, shape index: {}]
  %s3 = inlined_call_operand.hbm [shape: f32[16,128], index: 3, kind: input, shape index: {}]
  %s4 = inlined_call_operand.hbm [shape: f32[16,128], index: 4, kind: output, shape index: {}]
  %s5 = sld [smem:[#allocation0]]
  $region46: #{tpu_custom_call.1} parent=0
    _
  %s7 = ssub.s32 1, %s5
  %s8 = scalar_select 0, %s7, %s5
  $region1: #{tpu_custom_call.1} parent=0
    #allocation3 [shape = 'u8[8192]{0}', space=vmem, size = 0x2000, scoped, tag = 'input window, operand 0, single buffered']
    #allocation4 [shape = 's32[1]{0}', space=sflag, size = 0x4, scoped, tag = 'scoped memory for tpu_custom_call.1']
    #allocation5 [shape = 's32[1]{0}', space=sflag, size = 0x4, scoped, tag = 'scoped memory for tpu_custom_call.1']
    #allocation6 [shape = 'u8[65536]{0}', space=vmem, size = 0x10000, scoped, tag = 'input window, operand 1, single buffered']
    #allocation7 [shape = 's32[1]{0}', space=sflag, size = 0x4, scoped, tag = 'scoped memory for tpu_custom_call.1']
    #allocation8 [shape = 'u8[8192]{0}', space=vmem, size = 0x2000, scoped, tag = 'input window, operand 3, single buffered']
    #allocation9 [shape = 'u8[8192]{0}', space=vmem, size = 0x2000, scoped, tag = 'output window, operand 0, single buffered']
    %9 = vsyncpa [#allocation4], 0
    %10 = vsyncpa [#allocation7], 0
    %11 = vsyncpa [#allocation5], 0
    // Predicated region
    $region2: #{tpu_custom_call.1} parent=1 // pred_check
      _
    $region3: #{tpu_custom_call.1} parent=1 // pred_check_branch
      %13 = sbr.rel (0) target = $region5
    $region4: #{tpu_custom_call.1} parent=1 // pred_region
      %s15 = ssub.s32 256, 256
      %16 = vsyncadd [#allocation4], %s15
      %s17 = sshll.u32 [#allocation3], 4
      %s18 = int_to_ptr.vmem [resolvable:$true] %s17
      %23 = dma.hbm_to_vmem [thread:$0]  %s0, 256, %s18, [#allocation4], 128, 128, 8
    $region5: #{tpu_custom_call.1} parent=1 // pred_fallthru
      _
    // Predicated region
    $region6: #{tpu_custom_call.1} parent=1 // pred_check
      _
    $region7: #{tpu_custom_call.1} parent=1 // pred_check_branch
      %25 = sbr.rel (0) target = $region9
    $region8: #{tpu_custom_call.1} parent=1 // pred_region
      %s27 = ssub.s32 2048, 2048
      %28 = vsyncadd [#allocation7], %s27
      %s29 = sshll.u32 [#allocation6], 4
      %s30 = int_to_ptr.vmem [resolvable:$true] %s29
      %35 = dma.hbm_to_vmem [thread:$0]  %s1, 2048, %s30, [#allocation7], 128, 128, 8
    $region9: #{tpu_custom_call.1} parent=1 // pred_fallthru
      _
    // Predicated region
    $region10: #{tpu_custom_call.1} parent=1 // pred_check
      _
    $region11: #{tpu_custom_call.1} parent=1 // pred_check_branch
      %37 = sbr.rel (0) target = $region13
    $region12: #{tpu_custom_call.1} parent=1 // pred_region
      _
    $region13: #{tpu_custom_call.1} parent=1 // pred_fallthru
      _
    // Predicated region
    $region14: #{tpu_custom_call.1} parent=1 // pred_check
      _
    $region15: #{tpu_custom_call.1} parent=1 // pred_check_branch
      %39 = sbr.rel (0) target = $region17
    $region16: #{tpu_custom_call.1} parent=1 // pred_region
      %s41 = ssub.s32 256, 256
      %42 = vsyncadd [#allocation7], %s41
      %s43 = sshll.u32 [#allocation8], 4
      %s44 = int_to_ptr.vmem [resolvable:$true] %s43
      %49 = dma.hbm_to_vmem [thread:$0]  %s3, 256, %s44, [#allocation7], 128, 128, 8
    $region17: #{tpu_custom_call.1} parent=1 // pred_fallthru
      _
    // Predicated region
    $region18: #{tpu_custom_call.1} parent=1 // pred_check
      _
    $region19: #{tpu_custom_call.1} parent=1 // pred_check_branch
      %51 = sbr.rel (0) target = $region21
    $region20: #{tpu_custom_call.1} parent=1 // pred_region
      %52 = dma.done [#allocation4], 256
    $region21: #{tpu_custom_call.1} parent=1 // pred_fallthru
      _
    // Predicated region
    $region22: #{tpu_custom_call.1} parent=1 // pred_check
      _
    $region23: #{tpu_custom_call.1} parent=1 // pred_check_branch
      %54 = sbr.rel (0) target = $region25
    $region24: #{tpu_custom_call.1} parent=1 // pred_region
      %55 = dma.done [#allocation7], 2048
    $region25: #{tpu_custom_call.1} parent=1 // pred_fallthru
      _
    // Predicated region
    $region26: #{tpu_custom_call.1} parent=1 // pred_check
      _
    $region27: #{tpu_custom_call.1} parent=1 // pred_check_branch
      %57 = sbr.rel (0) target = $region29
    $region28: #{tpu_custom_call.1} parent=1 // pred_region
      %58 = dma.done [#allocation7], 256
    $region29: #{tpu_custom_call.1} parent=1 // pred_fallthru
      _
    %p59 = scmp.eq.s32.totalorder 0, 0
    // Predicated region
    $region30: #{tpu_custom_call.1} parent=1 // pred_check
      %p60 = pneg %p59
    $region31: #{tpu_custom_call.1} parent=1 // pred_check_branch
      %62 = sbr.rel (%p60) target = $region33
    $region32: #{tpu_custom_call.1} parent=1 // pred_region
      %63 = vst [vmem:[#allocation2] sm:$0xff] 0.0
      %64 = vst [vmem:[#allocation2 + $0x8] sm:$0xff] 0.0
    $region33: #{tpu_custom_call.1} parent=1 // pred_fallthru
      _
    %v65 = vld [vmem:[#allocation2] sm:$0xff]
    %v66 = vld [vmem:[#allocation2 + $0x8] sm:$0xff]
    %v67 = vld [vmem:[#allocation3] sm:$0xff]
    %v68 = vld [vmem:[#allocation3 + $0x8] sm:$0xff]
    %v69 = vld [vmem:[#allocation6] sm:$0xff]
    %v70 = vld [vmem:[#allocation6 + $0x8] sm:$0xff]
    %v71 = vld [vmem:[#allocation6 + $0x10] sm:$0xff]
    %v72 = vld [vmem:[#allocation6 + $0x18] sm:$0xff]
    %v73 = vld [vmem:[#allocation6 + $0x20] sm:$0xff]
    %v74 = vld [vmem:[#allocation6 + $0x28] sm:$0xff]
    %v75 = vld [vmem:[#allocation6 + $0x30] sm:$0xff]
    %v76 = vld [vmem:[#allocation6 + $0x38] sm:$0xff]
    %v77 = vld [vmem:[#allocation6 + $0x40] sm:$0xff]
    %v78 = vld [vmem:[#allocation6 + $0x48] sm:$0xff]
    %v79 = vld [vmem:[#allocation6 + $0x50] sm:$0xff]
    %v80 = vld [vmem:[#allocation6 + $0x58] sm:$0xff]
    %v81 = vld [vmem:[#allocation6 + $0x60] sm:$0xff]
    %v82 = vld [vmem:[#allocation6 + $0x68] sm:$0xff]
    %v83 = vld [vmem:[#allocation6 + $0x70] sm:$0xff]
    %v84 = vld [vmem:[#allocation6 + $0x78] sm:$0xff]
    %85 = vmatprep.subr.mxu0 0.0
    %86 = vmatpush1.msra.mxu0 %v69
    %87 = vmatprep.subr.mxu0 0.0
    %88 = vmatpush1.msra.mxu0 %v70
    %89 = vmatprep.subr.mxu0 0.0
    %90 = vmatpush1.msra.mxu0 %v71
    %91 = vmatprep.subr.mxu0 0.0
    %92 = vmatpush1.msra.mxu0 %v72
    %93 = vmatprep.subr.mxu0 0.0
    %94 = vmatpush1.msra.mxu0 %v73
    %95 = vmatprep.subr.mxu0 0.0
    %96 = vmatpush1.msra.mxu0 %v74
    %97 = vmatprep.subr.mxu0 0.0
    %98 = vmatpush1.msra.mxu0 %v75
    %99 = vmatprep.subr.mxu0 0.0
    %100 = vmatpush1.msra.mxu0 %v76
    %101 = vmatprep.subr.mxu0 0.0
    %102 = vmatpush1.msra.mxu0 %v77
    %103 = vmatprep.subr.mxu0 0.0
    %104 = vmatpush1.msra.mxu0 %v78
    %105 = vmatprep.subr.mxu0 0.0
    %106 = vmatpush1.msra.mxu0 %v79
    %107 = vmatprep.subr.mxu0 0.0
    %108 = vmatpush1.msra.mxu0 %v80
    %109 = vmatprep.subr.mxu0 0.0
    %110 = vmatpush1.msra.mxu0 %v81
    %111 = vmatprep.subr.mxu0 0.0
    %112 = vmatpush1.msra.mxu0 %v82
    %113 = vmatprep.subr.mxu0 0.0
    %114 = vmatpush1.msra.mxu0 %v83
    %115 = vmatprep.subr.mxu0 0.0
    %116 = vmatpush1.msra.mxu0 %v84
    %117 = vmatprep.subr.mxu0 0.0
    %118 = vmatpush1.msra.mxu0 0.0
    %119 = vmatprep.subr.mxu0 0.0
    %120 = vmatpush1.msra.mxu0 0.0
    %121 = vmatprep.subr.mxu0 0.0
    %122 = vmatpush1.msra.mxu0 0.0
    %123 = vmatprep.subr.mxu0 0.0
    %124 = vmatpush1.msra.mxu0 0.0
    %125 = vmatprep.subr.mxu0 0.0
    %126 = vmatpush1.msra.mxu0 0.0
    %127 = vmatprep.subr.mxu0 0.0
    %128 = vmatpush1.msra.mxu0 0.0
    %129 = vmatprep.subr.mxu0 0.0
    %130 = vmatpush1.msra.mxu0 0.0
    %131 = vmatprep.subr.mxu0 0.0
    %132 = vmatpush1.msra.mxu0 0.0
    %133 = vmatprep.subr.mxu0 0.0
    %134 = vmatpush1.msra.mxu0 0.0
    %135 = vmatprep.subr.mxu0 0.0
    %136 = vmatpush1.msra.mxu0 0.0
    %137 = vmatprep.subr.mxu0 0.0
    %138 = vmatpush1.msra.mxu0 0.0
    %139 = vmatprep.subr.mxu0 0.0
    %140 = vmatpush1.msra.mxu0 0.0
    %141 = vmatprep.subr.mxu0 0.0
    %142 = vmatpush1.msra.mxu0 0.0
    %143 = vmatprep.subr.mxu0 0.0
    %144 = vmatpush1.msra.mxu0 0.0
    %145 = vmatprep.subr.mxu0 0.0
    %146 = vmatpush1.msra.mxu0 0.0
    %147 = vmatprep.subr.mxu0 0.0
    %148 = vmatpush1.msra.mxu0 0.0
    %149 = vmatprep.mubr.f32.mxu0 0.0
    %150 = vmatmul.mubr.f32.gmra.mrb[0].mxu0 %v67
    %v151 = vpop.f32.mrb[0].mxu0
    %v152 = vadd.f32 0.0, %v151
    %v153 = vpop.f32.mrb[0].mxu0
    %154 = vmatprep.mubr.f32.mxu0 0.0
    %155 = vmatmul.mubr.f32.gmra.mrb[0].mxu0 %v68
    %v156 = vpop.f32.mrb[0].mxu0
    %v157 = vadd.f32 0.0, %v156
    %v158 = vpop.f32.mrb[0].mxu0
    %159 = vdwg.mxu0
    %v160 = vadd.f32 %v65, %v152
    %v161 = vadd.f32 %v66, %v157
    %162 = vst [vmem:[#allocation2] sm:$0xff] %v160
    %163 = vst [vmem:[#allocation2 + $0x8] sm:$0xff] %v161
    // Predicated region
    $region34: #{tpu_custom_call.1} parent=1 // pred_check
      %p164 = pneg %p59
    $region35: #{tpu_custom_call.1} parent=1 // pred_check_branch
      %166 = sbr.rel (%p164) target = $region37
    $region36: #{tpu_custom_call.1} parent=1 // pred_region
      %v167 = vld [vmem:[#allocation8] sm:$0xff]
      %v168 = vld [vmem:[#allocation8 + $0x8] sm:$0xff]
      %v169 = vld [vmem:[#allocation2] sm:$0xff]
      %v170 = vld [vmem:[#allocation2 + $0x8] sm:$0xff]
      %v171 = vadd.f32 %v167, %v169
      %v172 = vadd.f32 %v168, %v170
      %v173 = vld [vmem:[%s2] sm:$0x1]
      %v175 = vlaneseq
      %v176 = vshrl.u32 %v175, 7
      %v177 = vsub.s32 0, %v176
      %v178 = vrot.slane %v173, %v177
      %v180 = vadd.f32 %v171, %v178
      %v181 = vadd.f32 %v172, %v178
      %182 = vst [vmem:[#allocation9] sm:$0xff] %v180
      %183 = vst [vmem:[#allocation9 + $0x8] sm:$0xff] %v181
    $region37: #{tpu_custom_call.1} parent=1 // pred_fallthru
      _
    // Predicated region
    $region38: #{tpu_custom_call.1} parent=1 // pred_check
      _
    $region39: #{tpu_custom_call.1} parent=1 // pred_check_branch
      %185 = sbr.rel (0) target = $region41
    $region40: #{tpu_custom_call.1} parent=1 // pred_region
      %s187 = ssub.s32 256, 256
      %188 = vsyncadd [#allocation5], %s187
      %s189 = sshll.u32 [#allocation9], 4
      %s190 = int_to_ptr.vmem [resolvable:$true] %s189
      %195 = dma.vmem_to_hbm [thread:$0]  %s190, 256, %s4, [#allocation5], 128, 128, 8
    $region41: #{tpu_custom_call.1} parent=1 // pred_fallthru
      _
    // Predicated region
    $region42: #{tpu_custom_call.1} parent=1 // pred_check
      _
    $region43: #{tpu_custom_call.1} parent=1 // pred_check_branch
      %197 = sbr.rel (0) target = $region45
    $region44: #{tpu_custom_call.1} parent=1 // pred_region
      %198 = dma.done [#allocation5], 256
    $region45: #{tpu_custom_call.1} parent=1 // pred_fallthru
      _
    %199 = vsyncpa [#allocation4], 1
    %200 = vsyncpa [#allocation7], 1
    %201 = vsyncpa [#allocation5], 1

</llo_original>
